<compile_context>
chip_gen: v6e
topology: v6e:2x2x1
jax: 0.10.0
libtpu: 0.0.40
codegen_flags: <defaults>
</compile_context>

<pallas_src>
import functools
import math

import jax
import jax.numpy as jnp
from jax.experimental import pallas as pl
from jax.experimental.pallas import tpu as pltpu


def _celltype_kernel(xt_ref, prxt_ref, noiset_ref, w1t_ref, b1_ref, w2t_ref, b2_ref,
                     xrcnt_ref, embt_ref, mrgn_ref, *,
                     n_bit, tb, b_real, min_pos, min_sgnl, max_sgnl,
                     inv_log_scale, inv_bn, inv_bh):
    half = n_bit // 2

    # --- projection (MXU, f32): prj^T = prx^T @ X^T  -> (n_bit, tb) ---
    prjT = jnp.dot(prxt_ref[...], xt_ref[...], preferred_element_type=jnp.float32)

    # --- InstNrm: add Poisson noise (sampled in the wrapper glue), log ---
    S = prjT + noiset_ref[...]            # == exp(X1): reused below, no transcendental
    X1T = jnp.log(S)

    # --- per-column stable rank over the n_bit (sublane) axis == torch.sort(dim=1) ---
    # Static Python loop: n_bit is tiny, (j < row) folds to a constant mask per j, and
    # in this lane-dense layout each (n_bit, tb) array is only a handful of vregs.
    row = jax.lax.broadcasted_iota(jnp.int32, (n_bit, tb), 0)
    rank = jnp.zeros((n_bit, tb), jnp.int32)
    for j in range(n_bit):
        xj = X1T[j:j + 1, :]                          # (1, tb) static sublane slice
        less = xj < X1T
        tie = (xj == X1T) & (j < row)                 # stable tie-break
        rank = rank + (less | tie).astype(jnp.int32)

    # two middle order statistics -> per-column "median" l
    a_val = jnp.sum(jnp.where(rank == half - 1, X1T, 0.0), axis=0, keepdims=True)
    b_val = jnp.sum(jnp.where(rank == half, X1T, 0.0), axis=0, keepdims=True)
    l = (a_val + b_val) * 0.5                         # (1, tb)

    # --- margin penalties: per-tile masked partial sum (padded batch cols excluded) ---
    tile_start = pl.program_id(0) * tb
    col = jax.lax.broadcasted_iota(jnp.int32, (n_bit, tb), 1)
    valid = ((col + tile_start) < b_real).astype(jnp.float32)
    pen = (jnp.square(jnp.maximum(min_sgnl - prjT, 0.0)) +
           jnp.square(jnp.maximum(prjT - max_sgnl, 0.0))) * inv_bn
    pen = pen + jnp.where(rank >= half,
                          jnp.square(jnp.maximum(min_pos - S, 0.0)), 0.0) * inv_bh
    tile_mrgn = jnp.sum(pen * valid)
    mrgn_ref[...] = jnp.zeros((1, 128), jnp.float32) + tile_mrgn   # lane-dense partial

    # --- embedding (lane-dense store) ---
    embT = jnp.tanh((X1T - l) * inv_log_scale)
    embt_ref[...] = embT

    # --- reconstruction MLP (n_rcn_layers == 2): bf16 MXU operands, f32 accumulate ---
    hT = jnp.maximum(
        jnp.dot(w1t_ref[...], embT.astype(jnp.bfloat16),
                preferred_element_type=jnp.float32) + b1_ref[...], 0.0)
    xrcnT = jnp.maximum(
        jnp.dot(w2t_ref[...], hT.astype(jnp.bfloat16),
                preferred_element_type=jnp.float32) + b2_ref[...], 0.0)
    xrcnt_ref[...] = xrcnT


def celltype_net_forward(X, enc_w, noise, w1, b1, w2, b2, *,
                         mxpr=90000.0, min_pos=100000.0, min_sgnl=50000.0,
                         max_sgnl=250000.0, scale=15000.0, rnd=False, tb=256):
    """X:(B,n_gns)  enc_w:(n_gns,n_bit)  noise:(B,n_bit)  w1:(n_bit,n_mid) b1:(1,n_mid)
    w2:(n_mid,n_gsub) b2:(1,n_gsub).  tb: batch tile (multiple of 128 lanes);
    use 256-512 on v6e/v5e, halve on v7x (64 MiB VMEM) when n_gns is large."""
    B, n_gns = X.shape
    n_bit = enc_w.shape[1]
    n_mid = w1.shape[1]
    n_gsub = w2.shape[1]
    half = n_bit // 2
    f32 = jnp.float32

    tb = max(128, (int(tb) // 128) * 128)
    bp = pl.cdiv(B, tb) * tb
    num_tiles = bp // tb

    # --- hoisted, batch-independent encoder normalization (previously in-kernel) ---
    wts = jnp.exp(enc_w.astype(f32))
    prx = wts / jnp.sum(wts) * mxpr
    if rnd:
        prx = jnp.round(prx)
    # TODO(synk): dropout on prx (drprt > 0) not implemented; default drprt=0 is identity.

    # Lane-dense (feature, batch) layout; pad batch to a multiple of tb.
    xt = jnp.pad(X.astype(f32).T, ((0, 0), (0, bp - B)))
    noiset = jnp.pad(noise.astype(f32).T, ((0, 0), (0, bp - B)), constant_values=1.0)
    prxt = prx.T                                   # (n_bit, n_gns), f32
    w1t = w1.astype(jnp.bfloat16).T                # (n_mid, n_bit)
    w2t = w2.astype(jnp.bfloat16).T                # (n_gsub, n_mid)
    b1c = b1.astype(f32).reshape(n_mid, 1)
    b2c = b2.astype(f32).reshape(n_gsub, 1)

    kernel = functools.partial(
        _celltype_kernel,
        n_bit=n_bit, tb=tb, b_real=B,
        min_pos=float(min_pos), min_sgnl=float(min_sgnl), max_sgnl=float(max_sgnl),
        inv_log_scale=float(1.0 / math.log(scale)),
        inv_bn=float(1.0 / (B * n_bit)),
        inv_bh=float(1.0 / (B * (n_bit - half))))

    in_specs = [
        pl.BlockSpec((n_gns, tb), lambda i: (0, i)),       # X^T      (batch-tiled)
        pl.BlockSpec((n_bit, n_gns), lambda i: (0, 0)),    # prx^T    (resident)
        pl.BlockSpec((n_bit, tb), lambda i: (0, i)),       # noise^T  (batch-tiled)
        pl.BlockSpec((n_mid, n_bit), lambda i: (0, 0)),    # w1^T     (resident, bf16)
        pl.BlockSpec((n_mid, 1), lambda i: (0, 0)),        # b1
        pl.BlockSpec((n_gsub, n_mid), lambda i: (0, 0)),   # w2^T     (resident, bf16)
        pl.BlockSpec((n_gsub, 1), lambda i: (0, 0)),       # b2
    ]
    out_specs = (
        pl.BlockSpec((n_gsub, tb), lambda i: (0, i)),      # Xrcn^T
        pl.BlockSpec((n_bit, tb), lambda i: (0, i)),       # emb^T
        pl.BlockSpec((1, 128), lambda i: (0, i)),          # mrgn per-tile partials
    )
    out_shape = (
        jax.ShapeDtypeStruct((n_gsub, bp), f32),
        jax.ShapeDtypeStruct((n_bit, bp), f32),
        jax.ShapeDtypeStruct((1, num_tiles * 128), f32),
    )

    # VMEM budget hint: double-buffered batch-tiled blocks + resident weights + headroom.
    blk_bytes = 4 * tb * (n_gns + 2 * n_bit + n_gsub) + 4 * 128
    wgt_bytes = (4 * n_bit * n_gns + 2 * (n_mid * n_bit + n_gsub * n_mid)
                 + 4 * (n_mid + n_gsub))
    vmem_limit = int(min(max(4 * blk_bytes + 2 * wgt_bytes + (8 << 20), 32 << 20),
                         60 << 20))   # cap keeps it under v7x's 64 MiB physical VMEM

    xrcnt, embt, mrgn_parts = pl.pallas_call(
        kernel,
        grid=(num_tiles,),
        in_specs=in_specs,
        out_specs=out_specs,
        out_shape=out_shape,
        compiler_params=pltpu.CompilerParams(
            dimension_semantics=("parallel",),
            vmem_limit_bytes=vmem_limit),
    )(xt, prxt, noiset, w1t, b1c, w2t, b2c)

    xrcn = xrcnt[:, :B].T
    emb = embt[:, :B].T
    mrgn = jnp.sum(mrgn_parts.reshape(num_tiles, 128)[:, 0])
    return xrcn, emb, mrgn


def _reference_forward(X, enc_w, noise, w1, b1, w2, b2, *, mxpr, min_pos, min_sgnl,
                       max_sgnl, scale, rnd):
    """Plain-JAX reference of the PyTorch forward (same noise sample)."""
    wts = jnp.exp(enc_w)
    prx = wts / jnp.sum(wts) * mxpr
    if rnd:
        prx = jnp.round(prx)
    prj = X @ prx
    X1 = jnp.log(prj + noise)
    o = jnp.sort(X1, axis=1)
    half = X1.shape[1] // 2
    l = (o[:, half - 1:half] + o[:, half:half + 1]) * 0.5
    lower = jnp.mean(jnp.square(jnp.maximum(min_sgnl - prj, 0.0)))
    upper = jnp.mean(jnp.square(jnp.maximum(prj - max_sgnl, 0.0)))
    median = jnp.mean(jnp.square(jnp.maximum(min_pos - jnp.exp(o[:, half:]), 0.0)))
    emb = jnp.tanh((X1 - l) / math.log(scale))
    h = jnp.maximum(emb @ w1 + b1, 0.0)
    xrcn = jnp.maximum(h @ w2 + b2, 0.0)
    return xrcn, emb, lower + upper + median


if __name__ == "__main__":
    # small, module-consistent shapes
    B, n_gns, n_bit, n_gsub = 8, 32, 14, 16
    n_mid = max(n_gsub // 2, n_bit)          # = 14
    noise_cfg = (10000.0, 1000.0)

    key = jax.random.PRNGKey(0)
    kx, ke, kw1, kb1, kw2, kb2, kn1, kn2 = jax.random.split(key, 8)

    X = jax.random.uniform(kx, (B, n_gns), jnp.float32, minval=0.0, maxval=100.0)
    enc_w = jax.random.normal(ke, (n_gns, n_bit), jnp.float32)        # nn.Embedding weight
    w1 = jax.random.normal(kw1, (n_bit, n_mid), jnp.float32) / math.sqrt(n_bit)
    b1 = jax.random.normal(kb1, (1, n_mid), jnp.float32) * 0.01
    w2 = jax.random.normal(kw2, (n_mid, n_gsub), jnp.float32) / math.sqrt(n_mid)
    b2 = jax.random.normal(kb2, (1, n_gsub), jnp.float32) * 0.01

    # InstNrm noise term (glue): poisson(noise0 * ones + noise1 * randn)
    # TODO(synk): torch.poisson sampling stays in the wrapper glue; an in-kernel PRNG
    # normal-approximation would change the RNG semantics of the module.
    lam = noise_cfg[0] + noise_cfg[1] * jax.random.normal(kn1, (B, n_bit), jnp.float32)
    lam = jnp.maximum(lam, 0.0)
    pois_noise = jax.random.poisson(kn2, lam).astype(jnp.float32)

    hp = dict(mxpr=90000.0, min_pos=100000.0, min_sgnl=50000.0,
              max_sgnl=250000.0, scale=15000.0, rnd=False)

    xrcn, emb, mrgn = celltype_net_forward(X, enc_w, pois_noise, w1, b1, w2, b2,
                                           tb=128, **hp)
    jax.block_until_ready((xrcn, emb, mrgn))

    xrcn_r, emb_r, mrgn_r = _reference_forward(X, enc_w, pois_noise, w1, b1, w2, b2, **hp)
    jax.block_until_ready((xrcn_r, emb_r, mrgn_r))

    assert xrcn.shape == (B, n_gsub) and emb.shape == (B, n_bit) and mrgn.shape == ()
    assert bool(jnp.all(jnp.isfinite(xrcn))) and bool(jnp.isfinite(mrgn))
    # loose tolerances: bf16 MXU operands in the MLP + matmul-precision differences
    assert bool(jnp.allclose(emb, emb_r, atol=2e-2)), "emb mismatch"
    assert bool(jnp.allclose(xrcn, xrcn_r, atol=2e-1, rtol=1e-1)), "xrcn mismatch"
    assert bool(jnp.abs(mrgn - mrgn_r) <= 0.1 * jnp.abs(mrgn_r) + 1e-3), "mrgn mismatch"
    print("KERNEL_OK")
</pallas_src>

<mosaic_0001>
module attributes {stable_mosaic.version = 11 : i64} {
  func.func @_celltype_kernel(%arg0: i32, %arg1: memref<32x128xf32, #tpu.memory_space<vmem>>, %arg2: memref<14x32xf32, #tpu.memory_space<vmem>>, %arg3: memref<14x128xf32, #tpu.memory_space<vmem>>, %arg4: memref<14x14xbf16, #tpu.memory_space<vmem>>, %arg5: memref<14x1xf32, #tpu.memory_space<vmem>>, %arg6: memref<16x14xbf16, #tpu.memory_space<vmem>>, %arg7: memref<16x1xf32, #tpu.memory_space<vmem>>, %arg8: memref<16x128xf32, #tpu.memory_space<vmem>>, %arg9: memref<14x128xf32, #tpu.memory_space<vmem>>, %arg10: memref<1x128xf32, #tpu.memory_space<vmem>>) attributes {dimension_semantics = [#tpu.dimension_semantics<parallel>], iteration_bounds = array<i64: 1>, scalar_prefetch = 0 : i64, scratch_operands = 0 : i64, tpu.core_type = #tpu.core_type<tc>, window_params = [{transform_indices = @transform_0, window_bounds = array<i64: 32, 128>}, {pipeline_mode = #tpu.pipeline_mode<synchronous>, transform_indices = @transform_1, window_bounds = array<i64: 14, 32>}, {transform_indices = @transform_2, window_bounds = array<i64: 14, 128>}, {pipeline_mode = #tpu.pipeline_mode<synchronous>, transform_indices = @transform_3, window_bounds = array<i64: 14, 14>}, {pipeline_mode = #tpu.pipeline_mode<synchronous>, transform_indices = @transform_4, window_bounds = array<i64: 14, 1>}, {pipeline_mode = #tpu.pipeline_mode<synchronous>, transform_indices = @transform_5, window_bounds = array<i64: 16, 14>}, {pipeline_mode = #tpu.pipeline_mode<synchronous>, transform_indices = @transform_6, window_bounds = array<i64: 16, 1>}, {transform_indices = @transform_7, window_bounds = array<i64: 16, 128>}, {transform_indices = @transform_8, window_bounds = array<i64: 14, 128>}, {transform_indices = @transform_9, window_bounds = array<i64: 1, 128>}]} {
    %c0 = arith.constant 0 : index
    %c0_0 = arith.constant 0 : index
    %0 = vector.load %arg2[%c0, %c0_0] : memref<14x32xf32, #tpu.memory_space<vmem>>, vector<14x32xf32>
    %c0_1 = arith.constant 0 : index
    %c0_2 = arith.constant 0 : index
    %1 = vector.load %arg1[%c0_1, %c0_2] : memref<32x128xf32, #tpu.memory_space<vmem>>, vector<32x128xf32>
    %cst = arith.constant dense<0.000000e+00> : vector<14x128xf32>
    %2 = tpu.matmul %0, %1, %cst {dimension_numbers = #tpu.dot_dimension_numbers<[1], [0], [0], [1], [0, 0, 1, 1], [], []>} : vector<14x32xf32>, vector<32x128xf32>, vector<14x128xf32> -> vector<14x128xf32>
    %c0_3 = arith.constant 0 : index
    %c0_4 = arith.constant 0 : index
    %3 = vector.load %arg3[%c0_3, %c0_4] : memref<14x128xf32, #tpu.memory_space<vmem>>, vector<14x128xf32>
    %4 = arith.addf %2, %3 : vector<14x128xf32>
    %5 = math.log %4 : vector<14x128xf32>
    %6 = tpu.iota {dimensions = array<i32: 0>} : vector<14x128xi32>
    %c0_i32 = arith.constant 0 : i32
    %7 = vector.broadcast %c0_i32 : i32 to vector<14x128xi32>
    %8 = vector.extract_strided_slice %5 {offsets = [0, 0], sizes = [1, 128], strides = [1, 1]} : vector<14x128xf32> to vector<1x128xf32>
    %9 = vector.broadcast %8 : vector<1x128xf32> to vector<14x128xf32>
    %10 = arith.cmpf olt, %9, %5 : vector<14x128xf32>
    %11 = vector.broadcast %8 : vector<1x128xf32> to vector<14x128xf32>
    %12 = arith.cmpf oeq, %11, %5 : vector<14x128xf32>
    %c0_i32_5 = arith.constant 0 : i32
    %13 = vector.broadcast %c0_i32_5 : i32 to vector<14x128xi32>
    %14 = arith.cmpi sgt, %6, %13 : vector<14x128xi32>
    %15 = arith.andi %12, %14 : vector<14x128xi1>
    %16 = arith.ori %10, %15 : vector<14x128xi1>
    %17 = arith.extui %16 : vector<14x128xi1> to vector<14x128xi32>
    %18 = arith.addi %7, %17 : vector<14x128xi32>
    %19 = vector.extract_strided_slice %5 {offsets = [1, 0], sizes = [1, 128], strides = [1, 1]} : vector<14x128xf32> to vector<1x128xf32>
    %20 = vector.broadcast %19 : vector<1x128xf32> to vector<14x128xf32>
    %21 = arith.cmpf olt, %20, %5 : vector<14x128xf32>
    %22 = vector.broadcast %19 : vector<1x128xf32> to vector<14x128xf32>
    %23 = arith.cmpf oeq, %22, %5 : vector<14x128xf32>
    %c1_i32 = arith.constant 1 : i32
    %24 = vector.broadcast %c1_i32 : i32 to vector<14x128xi32>
    %25 = arith.cmpi sgt, %6, %24 : vector<14x128xi32>
    %26 = arith.andi %23, %25 : vector<14x128xi1>
    %27 = arith.ori %21, %26 : vector<14x128xi1>
    %28 = arith.extui %27 : vector<14x128xi1> to vector<14x128xi32>
    %29 = arith.addi %18, %28 : vector<14x128xi32>
    %30 = vector.extract_strided_slice %5 {offsets = [2, 0], sizes = [1, 128], strides = [1, 1]} : vector<14x128xf32> to vector<1x128xf32>
    %31 = vector.broadcast %30 : vector<1x128xf32> to vector<14x128xf32>
    %32 = arith.cmpf olt, %31, %5 : vector<14x128xf32>
    %33 = vector.broadcast %30 : vector<1x128xf32> to vector<14x128xf32>
    %34 = arith.cmpf oeq, %33, %5 : vector<14x128xf32>
    %c2_i32 = arith.constant 2 : i32
    %35 = vector.broadcast %c2_i32 : i32 to vector<14x128xi32>
    %36 = arith.cmpi sgt, %6, %35 : vector<14x128xi32>
    %37 = arith.andi %34, %36 : vector<14x128xi1>
    %38 = arith.ori %32, %37 : vector<14x128xi1>
    %39 = arith.extui %38 : vector<14x128xi1> to vector<14x128xi32>
    %40 = arith.addi %29, %39 : vector<14x128xi32>
    %41 = vector.extract_strided_slice %5 {offsets = [3, 0], sizes = [1, 128], strides = [1, 1]} : vector<14x128xf32> to vector<1x128xf32>
    %42 = vector.broadcast %41 : vector<1x128xf32> to vector<14x128xf32>
    %43 = arith.cmpf olt, %42, %5 : vector<14x128xf32>
    %44 = vector.broadcast %41 : vector<1x128xf32> to vector<14x128xf32>
    %45 = arith.cmpf oeq, %44, %5 : vector<14x128xf32>
    %c3_i32 = arith.constant 3 : i32
    %46 = vector.broadcast %c3_i32 : i32 to vector<14x128xi32>
    %47 = arith.cmpi sgt, %6, %46 : vector<14x128xi32>
    %48 = arith.andi %45, %47 : vector<14x128xi1>
    %49 = arith.ori %43, %48 : vector<14x128xi1>
    %50 = arith.extui %49 : vector<14x128xi1> to vector<14x128xi32>
    %51 = arith.addi %40, %50 : vector<14x128xi32>
    %52 = vector.extract_strided_slice %5 {offsets = [4, 0], sizes = [1, 128], strides = [1, 1]} : vector<14x128xf32> to vector<1x128xf32>
    %53 = vector.broadcast %52 : vector<1x128xf32> to vector<14x128xf32>
    %54 = arith.cmpf olt, %53, %5 : vector<14x128xf32>
    %55 = vector.broadcast %52 : vector<1x128xf32> to vector<14x128xf32>
    %56 = arith.cmpf oeq, %55, %5 : vector<14x128xf32>
    %c4_i32 = arith.constant 4 : i32
    %57 = vector.broadcast %c4_i32 : i32 to vector<14x128xi32>
    %58 = arith.cmpi sgt, %6, %57 : vector<14x128xi32>
    %59 = arith.andi %56, %58 : vector<14x128xi1>
    %60 = arith.ori %54, %59 : vector<14x128xi1>
    %61 = arith.extui %60 : vector<14x128xi1> to vector<14x128xi32>
    %62 = arith.addi %51, %61 : vector<14x128xi32>
    %63 = vector.extract_strided_slice %5 {offsets = [5, 0], sizes = [1, 128], strides = [1, 1]} : vector<14x128xf32> to vector<1x128xf32>
    %64 = vector.broadcast %63 : vector<1x128xf32> to vector<14x128xf32>
    %65 = arith.cmpf olt, %64, %5 : vector<14x128xf32>
    %66 = vector.broadcast %63 : vector<1x128xf32> to vector<14x128xf32>
    %67 = arith.cmpf oeq, %66, %5 : vector<14x128xf32>
    %c5_i32 = arith.constant 5 : i32
    %68 = vector.broadcast %c5_i32 : i32 to vector<14x128xi32>
    %69 = arith.cmpi sgt, %6, %68 : vector<14x128xi32>
    %70 = arith.andi %67, %69 : vector<14x128xi1>
    %71 = arith.ori %65, %70 : vector<14x128xi1>
    %72 = arith.extui %71 : vector<14x128xi1> to vector<14x128xi32>
    %73 = arith.addi %62, %72 : vector<14x128xi32>
    %74 = vector.extract_strided_slice %5 {offsets = [6, 0], sizes = [1, 128], strides = [1, 1]} : vector<14x128xf32> to vector<1x128xf32>
    %75 = vector.broadcast %74 : vector<1x128xf32> to vector<14x128xf32>
    %76 = arith.cmpf olt, %75, %5 : vector<14x128xf32>
    %77 = vector.broadcast %74 : vector<1x128xf32> to vector<14x128xf32>
    %78 = arith.cmpf oeq, %77, %5 : vector<14x128xf32>
    %c6_i32 = arith.constant 6 : i32
    %79 = vector.broadcast %c6_i32 : i32 to vector<14x128xi32>
    %80 = arith.cmpi sgt, %6, %79 : vector<14x128xi32>
    %81 = arith.andi %78, %80 : vector<14x128xi1>
    %82 = arith.ori %76, %81 : vector<14x128xi1>
    %83 = arith.extui %82 : vector<14x128xi1> to vector<14x128xi32>
    %84 = arith.addi %73, %83 : vector<14x128xi32>
    %85 = vector.extract_strided_slice %5 {offsets = [7, 0], sizes = [1, 128], strides = [1, 1]} : vector<14x128xf32> to vector<1x128xf32>
    %86 = vector.broadcast %85 : vector<1x128xf32> to vector<14x128xf32>
    %87 = arith.cmpf olt, %86, %5 : vector<14x128xf32>
    %88 = vector.broadcast %85 : vector<1x128xf32> to vector<14x128xf32>
    %89 = arith.cmpf oeq, %88, %5 : vector<14x128xf32>
    %c7_i32 = arith.constant 7 : i32
    %90 = vector.broadcast %c7_i32 : i32 to vector<14x128xi32>
    %91 = arith.cmpi sgt, %6, %90 : vector<14x128xi32>
    %92 = arith.andi %89, %91 : vector<14x128xi1>
    %93 = arith.ori %87, %92 : vector<14x128xi1>
    %94 = arith.extui %93 : vector<14x128xi1> to vector<14x128xi32>
    %95 = arith.addi %84, %94 : vector<14x128xi32>
    %96 = vector.extract_strided_slice %5 {offsets = [8, 0], sizes = [1, 128], strides = [1, 1]} : vector<14x128xf32> to vector<1x128xf32>
    %97 = vector.broadcast %96 : vector<1x128xf32> to vector<14x128xf32>
    %98 = arith.cmpf olt, %97, %5 : vector<14x128xf32>
    %99 = vector.broadcast %96 : vector<1x128xf32> to vector<14x128xf32>
    %100 = arith.cmpf oeq, %99, %5 : vector<14x128xf32>
    %c8_i32 = arith.constant 8 : i32
    %101 = vector.broadcast %c8_i32 : i32 to vector<14x128xi32>
    %102 = arith.cmpi sgt, %6, %101 : vector<14x128xi32>
    %103 = arith.andi %100, %102 : vector<14x128xi1>
    %104 = arith.ori %98, %103 : vector<14x128xi1>
    %105 = arith.extui %104 : vector<14x128xi1> to vector<14x128xi32>
    %106 = arith.addi %95, %105 : vector<14x128xi32>
    %107 = vector.extract_strided_slice %5 {offsets = [9, 0], sizes = [1, 128], strides = [1, 1]} : vector<14x128xf32> to vector<1x128xf32>
    %108 = vector.broadcast %107 : vector<1x128xf32> to vector<14x128xf32>
    %109 = arith.cmpf olt, %108, %5 : vector<14x128xf32>
    %110 = vector.broadcast %107 : vector<1x128xf32> to vector<14x128xf32>
    %111 = arith.cmpf oeq, %110, %5 : vector<14x128xf32>
    %c9_i32 = arith.constant 9 : i32
    %112 = vector.broadcast %c9_i32 : i32 to vector<14x128xi32>
    %113 = arith.cmpi sgt, %6, %112 : vector<14x128xi32>
    %114 = arith.andi %111, %113 : vector<14x128xi1>
    %115 = arith.ori %109, %114 : vector<14x128xi1>
    %116 = arith.extui %115 : vector<14x128xi1> to vector<14x128xi32>
    %117 = arith.addi %106, %116 : vector<14x128xi32>
    %118 = vector.extract_strided_slice %5 {offsets = [10, 0], sizes = [1, 128], strides = [1, 1]} : vector<14x128xf32> to vector<1x128xf32>
    %119 = vector.broadcast %118 : vector<1x128xf32> to vector<14x128xf32>
    %120 = arith.cmpf olt, %119, %5 : vector<14x128xf32>
    %121 = vector.broadcast %118 : vector<1x128xf32> to vector<14x128xf32>
    %122 = arith.cmpf oeq, %121, %5 : vector<14x128xf32>
    %c10_i32 = arith.constant 10 : i32
    %123 = vector.broadcast %c10_i32 : i32 to vector<14x128xi32>
    %124 = arith.cmpi sgt, %6, %123 : vector<14x128xi32>
    %125 = arith.andi %122, %124 : vector<14x128xi1>
    %126 = arith.ori %120, %125 : vector<14x128xi1>
    %127 = arith.extui %126 : vector<14x128xi1> to vector<14x128xi32>
    %128 = arith.addi %117, %127 : vector<14x128xi32>
    %129 = vector.extract_strided_slice %5 {offsets = [11, 0], sizes = [1, 128], strides = [1, 1]} : vector<14x128xf32> to vector<1x128xf32>
    %130 = vector.broadcast %129 : vector<1x128xf32> to vector<14x128xf32>
    %131 = arith.cmpf olt, %130, %5 : vector<14x128xf32>
    %132 = vector.broadcast %129 : vector<1x128xf32> to vector<14x128xf32>
    %133 = arith.cmpf oeq, %132, %5 : vector<14x128xf32>
    %c11_i32 = arith.constant 11 : i32
    %134 = vector.broadcast %c11_i32 : i32 to vector<14x128xi32>
    %135 = arith.cmpi sgt, %6, %134 : vector<14x128xi32>
    %136 = arith.andi %133, %135 : vector<14x128xi1>
    %137 = arith.ori %131, %136 : vector<14x128xi1>
    %138 = arith.extui %137 : vector<14x128xi1> to vector<14x128xi32>
    %139 = arith.addi %128, %138 : vector<14x128xi32>
    %140 = vector.extract_strided_slice %5 {offsets = [12, 0], sizes = [1, 128], strides = [1, 1]} : vector<14x128xf32> to vector<1x128xf32>
    %141 = vector.broadcast %140 : vector<1x128xf32> to vector<14x128xf32>
    %142 = arith.cmpf olt, %141, %5 : vector<14x128xf32>
    %143 = vector.broadcast %140 : vector<1x128xf32> to vector<14x128xf32>
    %144 = arith.cmpf oeq, %143, %5 : vector<14x128xf32>
    %c12_i32 = arith.constant 12 : i32
    %145 = vector.broadcast %c12_i32 : i32 to vector<14x128xi32>
    %146 = arith.cmpi sgt, %6, %145 : vector<14x128xi32>
    %147 = arith.andi %144, %146 : vector<14x128xi1>
    %148 = arith.ori %142, %147 : vector<14x128xi1>
    %149 = arith.extui %148 : vector<14x128xi1> to vector<14x128xi32>
    %150 = arith.addi %139, %149 : vector<14x128xi32>
    %151 = vector.extract_strided_slice %5 {offsets = [13, 0], sizes = [1, 128], strides = [1, 1]} : vector<14x128xf32> to vector<1x128xf32>
    %152 = vector.broadcast %151 : vector<1x128xf32> to vector<14x128xf32>
    %153 = arith.cmpf olt, %152, %5 : vector<14x128xf32>
    %154 = vector.broadcast %151 : vector<1x128xf32> to vector<14x128xf32>
    %155 = arith.cmpf oeq, %154, %5 : vector<14x128xf32>
    %c13_i32 = arith.constant 13 : i32
    %156 = vector.broadcast %c13_i32 : i32 to vector<14x128xi32>
    %157 = arith.cmpi sgt, %6, %156 : vector<14x128xi32>
    %158 = arith.andi %155, %157 : vector<14x128xi1>
    %159 = arith.ori %153, %158 : vector<14x128xi1>
    %160 = arith.extui %159 : vector<14x128xi1> to vector<14x128xi32>
    %161 = arith.addi %150, %160 : vector<14x128xi32>
    %c6_i32_6 = arith.constant 6 : i32
    %162 = vector.broadcast %c6_i32_6 : i32 to vector<14x128xi32>
    %163 = arith.cmpi eq, %161, %162 : vector<14x128xi32>
    %cst_7 = arith.constant 0.000000e+00 : f32
    %164 = vector.broadcast %cst_7 : f32 to vector<14x128xf32>
    %165 = arith.select %163, %5, %164 : vector<14x128xi1>, vector<14x128xf32>
    %cst_8 = arith.constant dense<0.000000e+00> : vector<128xf32>
    %166 = vector.multi_reduction <add>, %165, %cst_8 [0] : vector<14x128xf32> to vector<128xf32>
    %167 = vector.shape_cast %166 : vector<128xf32> to vector<1x128xf32>
    %c7_i32_9 = arith.constant 7 : i32
    %168 = vector.broadcast %c7_i32_9 : i32 to vector<14x128xi32>
    %169 = arith.cmpi eq, %161, %168 : vector<14x128xi32>
    %cst_10 = arith.constant 0.000000e+00 : f32
    %170 = vector.broadcast %cst_10 : f32 to vector<14x128xf32>
    %171 = arith.select %169, %5, %170 : vector<14x128xi1>, vector<14x128xf32>
    %cst_11 = arith.constant dense<0.000000e+00> : vector<128xf32>
    %172 = vector.multi_reduction <add>, %171, %cst_11 [0] : vector<14x128xf32> to vector<128xf32>
    %173 = vector.shape_cast %172 : vector<128xf32> to vector<1x128xf32>
    %174 = arith.addf %167, %173 : vector<1x128xf32>
    %cst_12 = arith.constant 5.000000e-01 : f32
    %175 = vector.broadcast %cst_12 : f32 to vector<1x128xf32>
    %176 = arith.mulf %174, %175 : vector<1x128xf32>
    %c128_i32 = arith.constant 128 : i32
    %177 = arith.muli %arg0, %c128_i32 : i32
    %178 = tpu.iota {dimensions = array<i32: 1>} : vector<14x128xi32>
    %179 = vector.broadcast %177 : i32 to vector<14x128xi32>
    %180 = arith.addi %178, %179 : vector<14x128xi32>
    %c8_i32_13 = arith.constant 8 : i32
    %181 = vector.broadcast %c8_i32_13 : i32 to vector<14x128xi32>
    %182 = arith.cmpi slt, %180, %181 : vector<14x128xi32>
    %183 = arith.extui %182 : vector<14x128xi1> to vector<14x128xi32>
    %184 = arith.sitofp %183 : vector<14x128xi32> to vector<14x128xf32>
    %cst_14 = arith.constant 5.000000e+04 : f32
    %185 = vector.broadcast %cst_14 : f32 to vector<14x128xf32>
    %186 = arith.subf %185, %2 : vector<14x128xf32>
    %cst_15 = arith.constant 0.000000e+00 : f32
    %187 = vector.broadcast %cst_15 : f32 to vector<14x128xf32>
    %188 = arith.maximumf %186, %187 : vector<14x128xf32>
    %189 = arith.mulf %188, %188 : vector<14x128xf32>
    %cst_16 = arith.constant 2.500000e+05 : f32
    %190 = vector.broadcast %cst_16 : f32 to vector<14x128xf32>
    %191 = arith.subf %2, %190 : vector<14x128xf32>
    %cst_17 = arith.constant 0.000000e+00 : f32
    %192 = vector.broadcast %cst_17 : f32 to vector<14x128xf32>
    %193 = arith.maximumf %191, %192 : vector<14x128xf32>
    %194 = arith.mulf %193, %193 : vector<14x128xf32>
    %195 = arith.addf %189, %194 : vector<14x128xf32>
    %cst_18 = arith.constant 0.00892857183 : f32
    %196 = vector.broadcast %cst_18 : f32 to vector<14x128xf32>
    %197 = arith.mulf %195, %196 : vector<14x128xf32>
    %c7_i32_19 = arith.constant 7 : i32
    %198 = vector.broadcast %c7_i32_19 : i32 to vector<14x128xi32>
    %199 = arith.cmpi sge, %161, %198 : vector<14x128xi32>
    %cst_20 = arith.constant 1.000000e+05 : f32
    %200 = vector.broadcast %cst_20 : f32 to vector<14x128xf32>
    %201 = arith.subf %200, %4 : vector<14x128xf32>
    %cst_21 = arith.constant 0.000000e+00 : f32
    %202 = vector.broadcast %cst_21 : f32 to vector<14x128xf32>
    %203 = arith.maximumf %201, %202 : vector<14x128xf32>
    %204 = arith.mulf %203, %203 : vector<14x128xf32>
    %cst_22 = arith.constant 0.000000e+00 : f32
    %205 = vector.broadcast %cst_22 : f32 to vector<14x128xf32>
    %206 = arith.select %199, %204, %205 : vector<14x128xi1>, vector<14x128xf32>
    %cst_23 = arith.constant 0.0178571437 : f32
    %207 = vector.broadcast %cst_23 : f32 to vector<14x128xf32>
    %208 = arith.mulf %206, %207 : vector<14x128xf32>
    %209 = arith.addf %197, %208 : vector<14x128xf32>
    %210 = arith.mulf %209, %184 : vector<14x128xf32>
    %211 = vector.shape_cast %210 : vector<14x128xf32> to vector<1x14x128xf32>
    %cst_24 = arith.constant dense<0.000000e+00> : vector<1xf32>
    %212 = vector.multi_reduction <add>, %211, %cst_24 [1, 2] : vector<1x14x128xf32> to vector<1xf32>
    %213 = vector.shape_cast %212 : vector<1xf32> to vector<1x1x1xf32>
    %214 = vector.extract %213[0, 0, 0] : f32 from vector<1x1x1xf32>
    %cst_25 = arith.constant 0.000000e+00 : f32
    %215 = vector.broadcast %cst_25 : f32 to vector<1x128xf32>
    %216 = vector.broadcast %214 : f32 to vector<1x128xf32>
    %217 = arith.addf %215, %216 : vector<1x128xf32>
    %c0_26 = arith.constant 0 : index
    %c0_27 = arith.constant 0 : index
    %218 = vector.load %arg10[%c0_26, %c0_27] : memref<1x128xf32, #tpu.memory_space<vmem>>, vector<1x128xf32>
    tpu.vector_store %arg10[%c0_26, %c0_27], %217 {strides = array<i32>} : memref<1x128xf32, #tpu.memory_space<vmem>>, vector<1x128xf32>,
    %219 = vector.broadcast %176 : vector<1x128xf32> to vector<14x128xf32>
    %220 = arith.subf %5, %219 : vector<14x128xf32>
    %cst_28 = arith.constant 0.10399545 : f32
    %221 = vector.broadcast %cst_28 : f32 to vector<14x128xf32>
    %222 = arith.mulf %220, %221 : vector<14x128xf32>
    %223 = math.tanh %222 : vector<14x128xf32>
    %c0_29 = arith.constant 0 : index
    %c0_30 = arith.constant 0 : index
    %224 = vector.load %arg9[%c0_29, %c0_30] : memref<14x128xf32, #tpu.memory_space<vmem>>, vector<14x128xf32>
    tpu.vector_store %arg9[%c0_29, %c0_30], %223 {strides = array<i32>} : memref<14x128xf32, #tpu.memory_space<vmem>>, vector<14x128xf32>,
    %c0_31 = arith.constant 0 : index
    %c0_32 = arith.constant 0 : index
    %225 = vector.load %arg4[%c0_31, %c0_32] : memref<14x14xbf16, #tpu.memory_space<vmem>>, vector<14x14xbf16>
    %226 = arith.truncf %223 : vector<14x128xf32> to vector<14x128xbf16>
    %cst_33 = arith.constant dense<0.000000e+00> : vector<14x128xf32>
    %227 = tpu.matmul %225, %226, %cst_33 {dimension_numbers = #tpu.dot_dimension_numbers<[1], [0], [0], [1], [0, 0, 1, 1], [], []>} : vector<14x14xbf16>, vector<14x128xbf16>, vector<14x128xf32> -> vector<14x128xf32>
    %c0_34 = arith.constant 0 : index
    %c0_35 = arith.constant 0 : index
    %228 = vector.load %arg5[%c0_34, %c0_35] : memref<14x1xf32, #tpu.memory_space<vmem>>, vector<14x1xf32>
    %229 = vector.broadcast %228 : vector<14x1xf32> to vector<14x128xf32>
    %230 = arith.addf %227, %229 : vector<14x128xf32>
    %cst_36 = arith.constant 0.000000e+00 : f32
    %231 = vector.broadcast %cst_36 : f32 to vector<14x128xf32>
    %232 = arith.maximumf %230, %231 : vector<14x128xf32>
    %c0_37 = arith.constant 0 : index
    %c0_38 = arith.constant 0 : index
    %233 = vector.load %arg6[%c0_37, %c0_38] : memref<16x14xbf16, #tpu.memory_space<vmem>>, vector<16x14xbf16>
    %234 = arith.truncf %232 : vector<14x128xf32> to vector<14x128xbf16>
    %cst_39 = arith.constant dense<0.000000e+00> : vector<16x128xf32>
    %235 = tpu.matmul %233, %234, %cst_39 {dimension_numbers = #tpu.dot_dimension_numbers<[1], [0], [0], [1], [0, 0, 1, 1], [], []>} : vector<16x14xbf16>, vector<14x128xbf16>, vector<16x128xf32> -> vector<16x128xf32>
    %c0_40 = arith.constant 0 : index
    %c0_41 = arith.constant 0 : index
    %236 = vector.load %arg7[%c0_40, %c0_41] : memref<16x1xf32, #tpu.memory_space<vmem>>, vector<16x1xf32>
    %237 = vector.broadcast %236 : vector<16x1xf32> to vector<16x128xf32>
    %238 = arith.addf %235, %237 : vector<16x128xf32>
    %cst_42 = arith.constant 0.000000e+00 : f32
    %239 = vector.broadcast %cst_42 : f32 to vector<16x128xf32>
    %240 = arith.maximumf %238, %239 : vector<16x128xf32>
    %c0_43 = arith.constant 0 : index
    %c0_44 = arith.constant 0 : index
    %241 = vector.load %arg8[%c0_43, %c0_44] : memref<16x128xf32, #tpu.memory_space<vmem>>, vector<16x128xf32>
    tpu.vector_store %arg8[%c0_43, %c0_44], %240 {strides = array<i32>} : memref<16x128xf32, #tpu.memory_space<vmem>>, vector<16x128xf32>,
    return
  }
  func.func @transform_0(%arg0: i32) -> (i32, i32) {
    %c0_i32 = arith.constant 0 : i32
    %c0_i32_0 = arith.constant 0 : i32
    return %c0_i32, %arg0 : i32, i32
  }
  func.func @transform_1(%arg0: i32) -> (i32, i32) {
    %c0_i32 = arith.constant 0 : i32
    %c0_i32_0 = arith.constant 0 : i32
    %c0_i32_1 = arith.constant 0 : i32
    return %c0_i32, %c0_i32_0 : i32, i32
  }
  func.func @transform_2(%arg0: i32) -> (i32, i32) {
    %c0_i32 = arith.constant 0 : i32
    %c0_i32_0 = arith.constant 0 : i32
    return %c0_i32, %arg0 : i32, i32
  }
  func.func @transform_3(%arg0: i32) -> (i32, i32) {
    %c0_i32 = arith.constant 0 : i32
    %c0_i32_0 = arith.constant 0 : i32
    %c0_i32_1 = arith.constant 0 : i32
    return %c0_i32, %c0_i32_0 : i32, i32
  }
  func.func @transform_4(%arg0: i32) -> (i32, i32) {
    %c0_i32 = arith.constant 0 : i32
    %c0_i32_0 = arith.constant 0 : i32
    %c0_i32_1 = arith.constant 0 : i32
    return %c0_i32, %c0_i32_0 : i32, i32
  }
  func.func @transform_5(%arg0: i32) -> (i32, i32) {
    %c0_i32 = arith.constant 0 : i32
    %c0_i32_0 = arith.constant 0 : i32
    %c0_i32_1 = arith.constant 0 : i32
    return %c0_i32, %c0_i32_0 : i32, i32
  }
  func.func @transform_6(%arg0: i32) -> (i32, i32) {
    %c0_i32 = arith.constant 0 : i32
    %c0_i32_0 = arith.constant 0 : i32
    %c0_i32_1 = arith.constant 0 : i32
    return %c0_i32, %c0_i32_0 : i32, i32
  }
  func.func @transform_7(%arg0: i32) -> (i32, i32) {
    %c0_i32 = arith.constant 0 : i32
    %c0_i32_0 = arith.constant 0 : i32
    return %c0_i32, %arg0 : i32, i32
  }
  func.func @transform_8(%arg0: i32) -> (i32, i32) {
    %c0_i32 = arith.constant 0 : i32
    %c0_i32_0 = arith.constant 0 : i32
    return %c0_i32, %arg0 : i32, i32
  }
  func.func @transform_9(%arg0: i32) -> (i32, i32) {
    %c0_i32 = arith.constant 0 : i32
    %c0_i32_0 = arith.constant 0 : i32
    return %c0_i32, %arg0 : i32, i32
  }
}

</mosaic_0001>

<llo_original>
// kernel: tpu_custom_call.1
$region0: #{tpu_custom_call.1}
  #allocation0 [shape = 'u32[]', space=smem, size = 0x4, offset = 0x4, fixed_abs, tag = 'smem constant byte address 0x4 - core index']
  #allocation1 [shape = 'u32[144,128]{1,0:T(1,128)}', space=vmem, size = 0x12000, scoped, tag = 'internal scratch']
  %s0 = inlined_call_operand.vmem [shape: f32[32,128], index: 0, kind: input, shape index: {}]
  %s1 = inlined_call_operand.hbm [shape: f32[14,32], index: 1, kind: input, shape index: {}]
  %s2 = inlined_call_operand.hbm [shape: f32[14,128], index: 2, kind: input, shape index: {}]
  %s3 = inlined_call_operand.hbm [shape: bf16[14,14], index: 3, kind: input, shape index: {}]
  %s4 = inlined_call_operand.vmem [shape: f32[14,1], index: 4, kind: input, shape index: {}]
  %s5 = inlined_call_operand.vmem [shape: bf16[16,14], index: 5, kind: input, shape index: {}]
  %s6 = inlined_call_operand.vmem [shape: f32[16,1], index: 6, kind: input, shape index: {}]
  %s7 = inlined_call_operand.hbm [shape: f32[16,128], index: 7, kind: output, shape index: {0}]
  %s8 = inlined_call_operand.hbm [shape: f32[14,128], index: 8, kind: output, shape index: {1}]
  %s9 = inlined_call_operand.hbm [shape: f32[1,128], index: 9, kind: output, shape index: {2}]
  %10 = xla_tuple %s7, %s8, %s9
  %s11 = sld [smem:[#allocation0]]
  $region66: #{tpu_custom_call.1} parent=0
    _
  %s13 = ssub.s32 1, %s11
  %s14 = scalar_select 0, %s13, %s11
  $region1: #{tpu_custom_call.1} parent=0
    #allocation2 [shape = 'u8[8192]{0}', space=vmem, size = 0x2000, scoped, tag = 'input window, operand 1, single buffered']
    #allocation3 [shape = 's32[1]{0}', space=sflag, size = 0x4, scoped, tag = 'scoped memory for tpu_custom_call.1']
    #allocation4 [shape = 's32[1]{0}', space=sflag, size = 0x4, scoped, tag = 'scoped memory for tpu_custom_call.1']
    #allocation5 [shape = 'u8[8192]{0}', space=vmem, size = 0x2000, scoped, tag = 'input window, operand 2, single buffered']
    #allocation6 [shape = 's32[1]{0}', space=sflag, size = 0x4, scoped, tag = 'scoped memory for tpu_custom_call.1']
    #allocation7 [shape = 'u8[4096]{0}', space=vmem, size = 0x1000, scoped, tag = 'input window, operand 3, single buffered']
    #allocation8 [shape = 'u8[8192]{0}', space=vmem, size = 0x2000, scoped, tag = 'output window, operand 0, single buffered']
    #allocation9 [shape = 'u8[8192]{0}', space=vmem, size = 0x2000, scoped, tag = 'output window, operand 1, single buffered']
    #allocation10 [shape = 's32[1]{0}', space=sflag, size = 0x4, scoped, tag = 'scoped memory for tpu_custom_call.1']
    #allocation11 [shape = 'u8[512]{0}', space=vmem, size = 0x400, scoped, tag = 'output window, operand 2, single buffered']
    %15 = vsyncpa [#allocation3], 0
    %16 = vsyncpa [#allocation6], 0
    %17 = vsyncpa [#allocation4], 0
    %18 = vsyncpa [#allocation10], 0
    // Predicated region
    $region2: #{tpu_custom_call.1} parent=1 // pred_check
      _
    $region3: #{tpu_custom_call.1} parent=1 // pred_check_branch
      %20 = sbr.rel (0) target = $region5
    $region4: #{tpu_custom_call.1} parent=1 // pred_region
      _
    $region5: #{tpu_custom_call.1} parent=1 // pred_fallthru
      _
    // Predicated region
    $region6: #{tpu_custom_call.1} parent=1 // pred_check
      _
    $region7: #{tpu_custom_call.1} parent=1 // pred_check_branch
      %22 = sbr.rel (0) target = $region9
    $region8: #{tpu_custom_call.1} parent=1 // pred_region
      %s24 = ssub.s32 256, 256
      %25 = vsyncadd [#allocation3], %s24
      %s26 = sshll.u32 [#allocation2], 4
      %s27 = int_to_ptr.vmem [resolvable:$true] %s26
      %32 = dma.hbm_to_vmem [thread:$0]  %s1, 256, %s27, [#allocation3], 128, 128, 8
    $region9: #{tpu_custom_call.1} parent=1 // pred_fallthru
      _
    // Predicated region
    $region10: #{tpu_custom_call.1} parent=1 // pred_check
      _
    $region11: #{tpu_custom_call.1} parent=1 // pred_check_branch
      %34 = sbr.rel (0) target = $region13
    $region12: #{tpu_custom_call.1} parent=1 // pred_region
      %s36 = ssub.s32 256, 256
      %37 = vsyncadd [#allocation6], %s36
      %s38 = sshll.u32 [#allocation5], 4
      %s39 = int_to_ptr.vmem [resolvable:$true] %s38
      %44 = dma.hbm_to_vmem [thread:$0]  %s2, 256, %s39, [#allocation6], 128, 128, 8
    $region13: #{tpu_custom_call.1} parent=1 // pred_fallthru
      _
    // Predicated region
    $region14: #{tpu_custom_call.1} parent=1 // pred_check
      _
    $region15: #{tpu_custom_call.1} parent=1 // pred_check_branch
      %46 = sbr.rel (0) target = $region17
    $region16: #{tpu_custom_call.1} parent=1 // pred_region
      %s48 = ssub.s32 128, 128
      %49 = vsyncadd [#allocation6], %s48
      %s50 = sshll.u32 [#allocation7], 4
      %s51 = int_to_ptr.vmem [resolvable:$true] %s50
      %56 = dma.hbm_to_vmem [thread:$0]  %s3, 128, %s51, [#allocation6], 64, 64, 4
    $region17: #{tpu_custom_call.1} parent=1 // pred_fallthru
      _
    // Predicated region
    $region18: #{tpu_custom_call.1} parent=1 // pred_check
      _
    $region19: #{tpu_custom_call.1} parent=1 // pred_check_branch
      %58 = sbr.rel (0) target = $region21
    $region20: #{tpu_custom_call.1} parent=1 // pred_region
      _
    $region21: #{tpu_custom_call.1} parent=1 // pred_fallthru
      _
    // Predicated region
    $region22: #{tpu_custom_call.1} parent=1 // pred_check
      _
    $region23: #{tpu_custom_call.1} parent=1 // pred_check_branch
      %60 = sbr.rel (0) target = $region25
    $region24: #{tpu_custom_call.1} parent=1 // pred_region
      _
    $region25: #{tpu_custom_call.1} parent=1 // pred_fallthru
      _
    // Predicated region
    $region26: #{tpu_custom_call.1} parent=1 // pred_check
      _
    $region27: #{tpu_custom_call.1} parent=1 // pred_check_branch
      %62 = sbr.rel (0) target = $region29
    $region28: #{tpu_custom_call.1} parent=1 // pred_region
      _
    $region29: #{tpu_custom_call.1} parent=1 // pred_fallthru
      _
    // Predicated region
    $region30: #{tpu_custom_call.1} parent=1 // pred_check
      _
    $region31: #{tpu_custom_call.1} parent=1 // pred_check_branch
      %64 = sbr.rel (0) target = $region33
    $region32: #{tpu_custom_call.1} parent=1 // pred_region
      %65 = dma.done [#allocation3], 256
    $region33: #{tpu_custom_call.1} parent=1 // pred_fallthru
      _
    // Predicated region
    $region34: #{tpu_custom_call.1} parent=1 // pred_check
      _
    $region35: #{tpu_custom_call.1} parent=1 // pred_check_branch
      %67 = sbr.rel (0) target = $region37
    $region36: #{tpu_custom_call.1} parent=1 // pred_region
      %68 = dma.done [#allocation6], 256
    $region37: #{tpu_custom_call.1} parent=1 // pred_fallthru
      _
    // Predicated region
    $region38: #{tpu_custom_call.1} parent=1 // pred_check
      _
    $region39: #{tpu_custom_call.1} parent=1 // pred_check_branch
      %70 = sbr.rel (0) target = $region41
    $region40: #{tpu_custom_call.1} parent=1 // pred_region
      %71 = dma.done [#allocation6], 128
    $region41: #{tpu_custom_call.1} parent=1 // pred_fallthru
      _
    %v73 = vld [vmem:[#allocation2] sm:$0xff]
    %v74 = vld [vmem:[#allocation2 + $0x8] sm:$0x3f]
    %v75 = vld [vmem:[%s0] sm:$0xff]
    %v76 = vld [vmem:[%s0 + $0x8] sm:$0xff]
    %v77 = vld [vmem:[%s0 + $0x10] sm:$0xff]
    %v78 = vld [vmem:[%s0 + $0x18] sm:$0xff]
    %vm79 = vcmask 261120
    %v81 = vsel %vm79, %v73, 0
    %v84 = vsel %vm79, %v74, 0
    %86 = vmatprep.subr.mxu0 0.0
    %87 = vmatpush1.msra.mxu0 0.0
    %88 = vmatprep.subr.mxu0 0.0
    %89 = vmatpush1.msra.mxu0 0.0
    %90 = vmatprep.subr.mxu0 0.0
    %91 = vmatpush1.msra.mxu0 0.0
    %92 = vmatprep.subr.mxu0 0.0
    %93 = vmatpush1.msra.mxu0 0.0
    %94 = vmatprep.subr.mxu0 0.0
    %95 = vmatpush1.msra.mxu0 0.0
    %96 = vmatprep.subr.mxu0 0.0
    %97 = vmatpush1.msra.mxu0 0.0
    %98 = vmatprep.subr.mxu0 0.0
    %99 = vmatpush1.msra.mxu0 0.0
    %100 = vmatprep.subr.mxu0 0.0
    %101 = vmatpush1.msra.mxu0 0.0
    %102 = vmatprep.subr.mxu0 0.0
    %103 = vmatpush1.msra.mxu0 0.0
    %104 = vmatprep.subr.mxu0 0.0
    %105 = vmatpush1.msra.mxu0 0.0
    %106 = vmatprep.subr.mxu0 0.0
    %107 = vmatpush1.msra.mxu0 0.0
    %108 = vmatprep.subr.mxu0 0.0
    %109 = vmatpush1.msra.mxu0 0.0
    %110 = vmatprep.subr.mxu0 0.0
    %111 = vmatpush1.msra.mxu0 %v78
    %112 = vmatprep.subr.mxu0 0.0
    %113 = vmatpush1.msra.mxu0 %v77
    %114 = vmatprep.subr.mxu0 0.0
    %115 = vmatpush1.msra.mxu0 %v76
    %116 = vmatprep.subr.mxu0 0.0
    %117 = vmatpush1.msra.mxu0 %v75
    %118 = vmatprep.subr.mxu0 0.0
    %119 = vmatpush2.msra.mxu0 0.0
    %120 = vmatprep.subr.mxu0 0.0
    %121 = vmatpush2.msra.mxu0 0.0
    %122 = vmatprep.subr.mxu0 0.0
    %123 = vmatpush2.msra.mxu0 0.0
    %124 = vmatprep.subr.mxu0 0.0
    %125 = vmatpush2.msra.mxu0 0.0
    %126 = vmatprep.subr.mxu0 0.0
    %127 = vmatpush2.msra.mxu0 0.0
    %128 = vmatprep.subr.mxu0 0.0
    %129 = vmatpush2.msra.mxu0 0.0
    %130 = vmatprep.subr.mxu0 0.0
    %131 = vmatpush2.msra.mxu0 0.0
    %132 = vmatprep.subr.mxu0 0.0
    %133 = vmatpush2.msra.mxu0 0.0
    %134 = vmatprep.subr.mxu0 0.0
    %135 = vmatpush2.msra.mxu0 0.0
    %136 = vmatprep.subr.mxu0 0.0
    %137 = vmatpush2.msra.mxu0 0.0
    %138 = vmatprep.subr.mxu0 0.0
    %139 = vmatpush2.msra.mxu0 0.0
    %140 = vmatprep.subr.mxu0 0.0
    %141 = vmatpush2.msra.mxu0 0.0
    %142 = vmatprep.subr.mxu0 0.0
    %143 = vmatpush2.msra.mxu0 0.0
    %144 = vmatprep.subr.mxu0 0.0
    %145 = vmatpush2.msra.mxu0 0.0
    %146 = vmatprep.subr.mxu0 0.0
    %147 = vmatpush2.msra.mxu0 0.0
    %148 = vmatprep.subr.mxu0 0.0
    %149 = vmatpush2.msra.mxu0 0.0
    %150 = vmatprep.mubr.f32.mxu0 0.0
    %151 = vmatmul.mubr.f32.gmra.mxu0 %v81
    %v152 = vpop.f32.mrf.mxu0
    %v153 = vadd.f32 0.0, %v152
    %v154 = vpop.f32.mrf.mxu0
    %155 = vmatprep.mubr.f32.mxu0 0.0
    %156 = vmatmul.mubr.f32.gmra.mxu0 %v84
    %v157 = vpop.f32.mrf.mxu0
    %v158 = vadd.f32 0.0, %v157
    %v159 = vpop.f32.mrf.mxu0
    %160 = vdwg.mxu0
    %v161 = vld [vmem:[#allocation5] sm:$0xff]
    %v162 = vld [vmem:[#allocation5 + $0x8] sm:$0x3f]
    %v163 = vadd.f32 %v153, %v161
    %v164 = vadd.f32 %v158, %v162
    %v165 = vlog2.pop %v163
    %v166 = vmul.f32 %v165, 0.6931472
    %v167 = vlog2.pop %v164
    %v168 = vmul.f32 %v167, 0.6931472
    %v169 = vlaneseq
    %v170 = vshrl.u32 %v169, 7
    %v171 = vadd.s32 %v170, 8
    %v172 = vlaneseq
    %v173 = vshrl.u32 %v172, 7
    %v174 = vsub.s32 0, %v173
    %v175 = vrot.slane %v166, %v174
    %vm176 = vcmp.lt.f32.partialorder %v175, %v166
    %vm177 = vcmp.lt.f32.partialorder %v175, %v168
    %vm178 = vcmp.eq.f32.partialorder %v175, %v166
    %vm179 = vcmp.eq.f32.partialorder %v175, %v168
    %vm180 = vcmp.gt.s32.totalorder %v170, 0
    %vm181 = vcmp.gt.s32.totalorder %v171, 0
    %vm182 = vmand %vm178, %vm180
    %vm183 = vmand %vm179, %vm181
    %vm184 = vmor %vm176, %vm182
    %vm185 = vmor %vm177, %vm183
    %v186 = vsel %vm184, 1, 0
    %v187 = vsel %vm185, 1, 0
    %v188 = vlaneseq
    %v189 = vshrl.u32 %v188, 7
    %v190 = vsub.s32 1, %v189
    %v191 = vrot.slane %v166, %v190
    %vm192 = vcmp.lt.f32.partialorder %v191, %v166
    %vm193 = vcmp.lt.f32.partialorder %v191, %v168
    %vm194 = vcmp.eq.f32.partialorder %v191, %v166
    %vm195 = vcmp.eq.f32.partialorder %v191, %v168
    %vm196 = vcmp.gt.s32.totalorder %v170, 1
    %vm197 = vcmp.gt.s32.totalorder %v171, 1
    %vm198 = vmand %vm194, %vm196
    %vm199 = vmand %vm195, %vm197
    %vm200 = vmor %vm192, %vm198
    %vm201 = vmor %vm193, %vm199
    %v202 = vsel %vm200, 1, 0
    %v203 = vsel %vm201, 1, 0
    %v204 = vadd.s32 %v186, %v202
    %v205 = vadd.s32 %v187, %v203
    %v206 = vlaneseq
    %v207 = vshrl.u32 %v206, 7
    %v208 = vsub.s32 2, %v207
    %v209 = vrot.slane %v166, %v208
    %vm210 = vcmp.lt.f32.partialorder %v209, %v166
    %vm211 = vcmp.lt.f32.partialorder %v209, %v168
    %vm212 = vcmp.eq.f32.partialorder %v209, %v166
    %vm213 = vcmp.eq.f32.partialorder %v209, %v168
    %vm214 = vcmp.gt.s32.totalorder %v170, 2
    %vm215 = vcmp.gt.s32.totalorder %v171, 2
    %vm216 = vmand %vm212, %vm214
    %vm217 = vmand %vm213, %vm215
    %vm218 = vmor %vm210, %vm216
    %vm219 = vmor %vm211, %vm217
    %v220 = vsel %vm218, 1, 0
    %v221 = vsel %vm219, 1, 0
    %v222 = vadd.s32 %v204, %v220
    %v223 = vadd.s32 %v205, %v221
    %v224 = vlaneseq
    %v225 = vshrl.u32 %v224, 7
    %v226 = vsub.s32 3, %v225
    %v227 = vrot.slane %v166, %v226
    %vm228 = vcmp.lt.f32.partialorder %v227, %v166
    %vm229 = vcmp.lt.f32.partialorder %v227, %v168
    %vm230 = vcmp.eq.f32.partialorder %v227, %v166
    %vm231 = vcmp.eq.f32.partialorder %v227, %v168
    %vm232 = vcmp.gt.s32.totalorder %v170, 3
    %vm233 = vcmp.gt.s32.totalorder %v171, 3
    %vm234 = vmand %vm230, %vm232
    %vm235 = vmand %vm231, %vm233
    %vm236 = vmor %vm228, %vm234
    %vm237 = vmor %vm229, %vm235
    %v238 = vsel %vm236, 1, 0
    %v239 = vsel %vm237, 1, 0
    %v240 = vadd.s32 %v222, %v238
    %v241 = vadd.s32 %v223, %v239
    %v242 = vlaneseq
    %v243 = vshrl.u32 %v242, 7
    %v244 = vsub.s32 4, %v243
    %v245 = vrot.slane %v166, %v244
    %vm246 = vcmp.lt.f32.partialorder %v245, %v166
    %vm247 = vcmp.lt.f32.partialorder %v245, %v168
    %vm248 = vcmp.eq.f32.partialorder %v245, %v166
    %vm249 = vcmp.eq.f32.partialorder %v245, %v168
    %vm250 = vcmp.gt.s32.totalorder %v170, 4
    %vm251 = vcmp.gt.s32.totalorder %v171, 4
    %vm252 = vmand %vm248, %vm250
    %vm253 = vmand %vm249, %vm251
    %vm254 = vmor %vm246, %vm252
    %vm255 = vmor %vm247, %vm253
    %v256 = vsel %vm254, 1, 0
    %v257 = vsel %vm255, 1, 0
    %v258 = vadd.s32 %v240, %v256
    %v259 = vadd.s32 %v241, %v257
    %v260 = vlaneseq
    %v261 = vshrl.u32 %v260, 7
    %v262 = vsub.s32 5, %v261
    %v263 = vrot.slane %v166, %v262
    %vm264 = vcmp.lt.f32.partialorder %v263, %v166
    %vm265 = vcmp.lt.f32.partialorder %v263, %v168
    %vm266 = vcmp.eq.f32.partialorder %v263, %v166
    %vm267 = vcmp.eq.f32.partialorder %v263, %v168
    %vm268 = vcmp.gt.s32.totalorder %v170, 5
    %vm269 = vcmp.gt.s32.totalorder %v171, 5
    %vm270 = vmand %vm266, %vm268
    %vm271 = vmand %vm267, %vm269
    %vm272 = vmor %vm264, %vm270
    %vm273 = vmor %vm265, %vm271
    %v274 = vsel %vm272, 1, 0
    %v275 = vsel %vm273, 1, 0
    %v276 = vadd.s32 %v258, %v274
    %v277 = vadd.s32 %v259, %v275
    %v278 = vlaneseq
    %v279 = vshrl.u32 %v278, 7
    %v280 = vsub.s32 6, %v279
    %v281 = vrot.slane %v166, %v280
    %vm282 = vcmp.lt.f32.partialorder %v281, %v166
    %vm283 = vcmp.lt.f32.partialorder %v281, %v168
    %vm284 = vcmp.eq.f32.partialorder %v281, %v166
    %vm285 = vcmp.eq.f32.partialorder %v281, %v168
    %vm286 = vcmp.gt.s32.totalorder %v170, 6
    %vm287 = vcmp.gt.s32.totalorder %v171, 6
    %vm288 = vmand %vm284, %vm286
    %vm289 = vmand %vm285, %vm287
    %vm290 = vmor %vm282, %vm288
    %vm291 = vmor %vm283, %vm289
    %v292 = vsel %vm290, 1, 0
    %v293 = vsel %vm291, 1, 0
    %v294 = vadd.s32 %v276, %v292
    %v295 = vadd.s32 %v277, %v293
    %v296 = vlaneseq
    %v297 = vshrl.u32 %v296, 7
    %v298 = vsub.s32 7, %v297
    %v299 = vrot.slane %v166, %v298
    %vm300 = vcmp.lt.f32.partialorder %v299, %v166
    %vm301 = vcmp.lt.f32.partialorder %v299, %v168
    %vm302 = vcmp.eq.f32.partialorder %v299, %v166
    %vm303 = vcmp.eq.f32.partialorder %v299, %v168
    %vm304 = vcmp.gt.s32.totalorder %v170, 7
    %vm305 = vcmp.gt.s32.totalorder %v171, 7
    %vm306 = vmand %vm302, %vm304
    %vm307 = vmand %vm303, %vm305
    %vm308 = vmor %vm300, %vm306
    %vm309 = vmor %vm301, %vm307
    %v310 = vsel %vm308, 1, 0
    %v311 = vsel %vm309, 1, 0
    %v312 = vadd.s32 %v294, %v310
    %v313 = vadd.s32 %v295, %v311
    %v314 = vlaneseq
    %v315 = vshrl.u32 %v314, 7
    %v316 = vsub.s32 0, %v315
    %v317 = vrot.slane %v168, %v316
    %vm318 = vcmp.lt.f32.partialorder %v317, %v166
    %vm319 = vcmp.lt.f32.partialorder %v317, %v168
    %vm320 = vcmp.eq.f32.partialorder %v317, %v166
    %vm321 = vcmp.eq.f32.partialorder %v317, %v168
    %vm322 = vcmp.gt.s32.totalorder %v170, 8
    %vm323 = vcmp.gt.s32.totalorder %v171, 8
    %vm324 = vmand %vm320, %vm322
    %vm325 = vmand %vm321, %vm323
    %vm326 = vmor %vm318, %vm324
    %vm327 = vmor %vm319, %vm325
    %v328 = vsel %vm326, 1, 0
    %v329 = vsel %vm327, 1, 0
    %v330 = vadd.s32 %v312, %v328
    %v331 = vadd.s32 %v313, %v329
    %v332 = vlaneseq
    %v333 = vshrl.u32 %v332, 7
    %v334 = vsub.s32 1, %v333
    %v335 = vrot.slane %v168, %v334
    %vm336 = vcmp.lt.f32.partialorder %v335, %v166
    %vm337 = vcmp.lt.f32.partialorder %v335, %v168
    %vm338 = vcmp.eq.f32.partialorder %v335, %v166
    %vm339 = vcmp.eq.f32.partialorder %v335, %v168
    %vm340 = vcmp.gt.s32.totalorder %v170, 9
    %vm341 = vcmp.gt.s32.totalorder %v171, 9
    %vm342 = vmand %vm338, %vm340
    %vm343 = vmand %vm339, %vm341
    %vm344 = vmor %vm336, %vm342
    %vm345 = vmor %vm337, %vm343
    %v346 = vsel %vm344, 1, 0
    %v347 = vsel %vm345, 1, 0
    %v348 = vadd.s32 %v330, %v346
    %v349 = vadd.s32 %v331, %v347
    %v350 = vlaneseq
    %v351 = vshrl.u32 %v350, 7
    %v352 = vsub.s32 2, %v351
    %v353 = vrot.slane %v168, %v352
    %vm354 = vcmp.lt.f32.partialorder %v353, %v166
    %vm355 = vcmp.lt.f32.partialorder %v353, %v168
    %vm356 = vcmp.eq.f32.partialorder %v353, %v166
    %vm357 = vcmp.eq.f32.partialorder %v353, %v168
    %vm358 = vcmp.gt.s32.totalorder %v170, 10
    %vm359 = vcmp.gt.s32.totalorder %v171, 10
    %vm360 = vmand %vm356, %vm358
    %vm361 = vmand %vm357, %vm359
    %vm362 = vmor %vm354, %vm360
    %vm363 = vmor %vm355, %vm361
    %v364 = vsel %vm362, 1, 0
    %v365 = vsel %vm363, 1, 0
    %v366 = vadd.s32 %v348, %v364
    %v367 = vadd.s32 %v349, %v365
    %v368 = vlaneseq
    %v369 = vshrl.u32 %v368, 7
    %v370 = vsub.s32 3, %v369
    %v371 = vrot.slane %v168, %v370
    %vm372 = vcmp.lt.f32.partialorder %v371, %v166
    %vm373 = vcmp.lt.f32.partialorder %v371, %v168
    %vm374 = vcmp.eq.f32.partialorder %v371, %v166
    %vm375 = vcmp.eq.f32.partialorder %v371, %v168
    %vm376 = vcmp.gt.s32.totalorder %v170, 11
    %vm377 = vcmp.gt.s32.totalorder %v171, 11
    %vm378 = vmand %vm374, %vm376
    %vm379 = vmand %vm375, %vm377
    %vm380 = vmor %vm372, %vm378
    %vm381 = vmor %vm373, %vm379
    %v382 = vsel %vm380, 1, 0
    %v383 = vsel %vm381, 1, 0
    %v384 = vadd.s32 %v366, %v382
    %v385 = vadd.s32 %v367, %v383
    %v386 = vlaneseq
    %v387 = vshrl.u32 %v386, 7
    %v388 = vsub.s32 4, %v387
    %v389 = vrot.slane %v168, %v388
    %vm390 = vcmp.lt.f32.partialorder %v389, %v166
    %vm391 = vcmp.lt.f32.partialorder %v389, %v168
    %vm392 = vcmp.eq.f32.partialorder %v389, %v166
    %vm393 = vcmp.eq.f32.partialorder %v389, %v168
    %vm394 = vcmp.gt.s32.totalorder %v170, 12
    %vm395 = vcmp.gt.s32.totalorder %v171, 12
    %vm396 = vmand %vm392, %vm394
    %vm397 = vmand %vm393, %vm395
    %vm398 = vmor %vm390, %vm396
    %vm399 = vmor %vm391, %vm397
    %v400 = vsel %vm398, 1, 0
    %v401 = vsel %vm399, 1, 0
    %v402 = vadd.s32 %v384, %v400
    %v403 = vadd.s32 %v385, %v401
    %v404 = vlaneseq
    %v405 = vshrl.u32 %v404, 7
    %v406 = vsub.s32 5, %v405
    %v407 = vrot.slane %v168, %v406
    %vm408 = vcmp.lt.f32.partialorder %v407, %v166
    %vm409 = vcmp.lt.f32.partialorder %v407, %v168
    %vm410 = vcmp.eq.f32.partialorder %v407, %v166
    %vm411 = vcmp.eq.f32.partialorder %v407, %v168
    %vm412 = vcmp.gt.s32.totalorder %v170, 13
    %vm413 = vcmp.gt.s32.totalorder %v171, 13
    %vm414 = vmand %vm410, %vm412
    %vm415 = vmand %vm411, %vm413
    %vm416 = vmor %vm408, %vm414
    %vm417 = vmor %vm409, %vm415
    %v418 = vsel %vm416, 1, 0
    %v419 = vsel %vm417, 1, 0
    %v420 = vadd.s32 %v402, %v418
    %v421 = vadd.s32 %v403, %v419
    %vm422 = vcmp.eq.s32.totalorder %v420, 6
    %vm423 = vcmp.eq.s32.totalorder %v421, 6
    %v424 = vsel %vm422, %v166, 0.0
    %v425 = vsel %vm423, %v168, 0.0
    %vm426 = vcmask 1045504
    %v427 = vsel %vm426, %v425, 0.0
    %v428 = vadd.f32 %v424, %v427
    %v429 = vrot.slane %v428, 4
    %v430 = vadd.f32 %v428, %v429
    %v431 = vrot.slane %v430, 2
    %v432 = vadd.f32 %v430, %v431
    %v433 = vrot.slane %v432, 1
    %v434 = vadd.f32 %v432, %v433
    %vm435 = vcmp.eq.s32.totalorder %v420, 7
    %vm436 = vcmp.eq.s32.totalorder %v421, 7
    %v437 = vsel %vm435, %v166, 0.0
    %v438 = vsel %vm436, %v168, 0.0
    %v439 = vsel %vm426, %v438, 0.0
    %v440 = vadd.f32 %v437, %v439
    %v441 = vrot.slane %v440, 4
    %v442 = vadd.f32 %v440, %v441
    %v443 = vrot.slane %v442, 2
    %v444 = vadd.f32 %v442, %v443
    %v445 = vrot.slane %v444, 1
    %v446 = vadd.f32 %v444, %v445
    %v447 = vadd.f32 %v434, %v446
    %v448 = vmul.f32 %v447, 0.5
    %s449 = smul.u32 0, 128
    %v450 = vlaneseq
    %v451 = vand.u32 %v450, 127
    %v452 = vstv %s449
    %v453 = vadd.s32 %v451, %v452
    %vm454 = vcmp.lt.s32.totalorder %v453, 8
    %v455 = vsel %vm454, 1, 0
    %v456 = vcvt.s32.f32 %v455
    %v457 = vsub.f32 50000.0, %v153
    %v458 = vsub.f32 50000.0, %v158
    %v459 = vmax.f32 %v457, 0.0
    %v460 = vmax.f32 %v458, 0.0
    %v461 = vmul.f32 %v459, %v459
    %v462 = vmul.f32 %v460, %v460
    %v463 = vsub.f32 %v153, 250000.0
    %v464 = vsub.f32 %v158, 250000.0
    %v465 = vmax.f32 %v463, 0.0
    %v466 = vmax.f32 %v464, 0.0
    %v467 = vmul.f32 %v465, %v465
    %v468 = vmul.f32 %v466, %v466
    %v469 = vadd.f32 %v461, %v467
    %v470 = vadd.f32 %v462, %v468
    %v471 = vmul.f32 %v469, 0.008928572
    %v472 = vmul.f32 %v470, 0.008928572
    %vm473 = vcmp.ge.s32.totalorder %v420, 7
    %vm474 = vcmp.ge.s32.totalorder %v421, 7
    %v475 = vsub.f32 100000.0, %v163
    %v476 = vsub.f32 100000.0, %v164
    %v477 = vmax.f32 %v475, 0.0
    %v478 = vmax.f32 %v476, 0.0
    %v479 = vmul.f32 %v477, %v477
    %v480 = vmul.f32 %v478, %v478
    %v481 = vsel %vm473, %v479, 0.0
    %v482 = vsel %vm474, %v480, 0.0
    %v483 = vmul.f32 %v481, 0.017857144
    %v484 = vmul.f32 %v482, 0.017857144
    %v485 = vadd.f32 %v471, %v483
    %v486 = vadd.f32 %v472, %v484
    %v487 = vmul.f32 %v485, %v456
    %v488 = vmul.f32 %v486, %v456
    %v489 = vsel %vm426, %v488, 0.0
    %v490 = vadd.f32 %v487, %v489
    %491 = vadd.xlane.f32.xlu0 %v490
    %v492 = vpop.xlane.xlu0 %491
    %v493 = vrot.slane %v492, 4
    %v494 = vadd.f32 %v492, %v493
    %v495 = vrot.slane %v494, 2
    %v496 = vadd.f32 %v494, %v495
    %v497 = vrot.slane %v496, 1
    %v498 = vadd.f32 %v496, %v497
    %s499 = vtos %v498
    %v500 = vstv %s499
    %v501 = vadd.f32 %v500, 0.0
    %502 = vst [vmem:[#allocation11] sm:$0x1] %v501
    %v503 = vsub.f32 %v166, %v448
    %v504 = vsub.f32 %v168, %v448
    %v505 = vmul.f32 %v503, 0.10399545
    %v506 = vmul.f32 %v504, 0.10399545
    %v507 = vtanh.pop %v505
    %v508 = vtanh.pop %v506
    %509 = vst [vmem:[#allocation9] sm:$0xff] %v507
    %510 = vst [vmem:[#allocation9 + $0x8] sm:$0x3f] %v508
    %v511 = vld [vmem:[#allocation7] sm:$0xf]
    %v512 = vld [vmem:[#allocation7 + $0x4] sm:$0x7]
    %v513 = vpack.c.bf16 %v508, %v507
    %v514 = vld [vmem:[%s4] sm:$0xff]
    %v515 = vld [vmem:[%s4 + $0x8] sm:$0x3f]
    %517 = vset.pattern.permute.xlu0 0
    %518 = vperm.xlu0 %517, %v514
    %v519 = vpop.permute.xlu0 %518
    %522 = vset.pattern.permute.xlu0 0
    %523 = vperm.xlu0 %522, %v515
    %v524 = vpop.permute.xlu0 %523
    %v528 = vunpack.c.l.b16 %v511
    %v529 = vunpack.c.l.b16 %v512
    %v530 = vpack.c.b16 %v529, %v528
    %vm531 = vcmask 113664
    %v533 = vsel %vm531, %v530, 0
    %vm535 = vcmask 1046528
    %v537 = vsel %vm535, %v513, 0
    %539 = vmatprep.subr.bf16.mxu0 0
    %540 = vmatpush1.bf16.msra.mxu0 0
    %541 = vmatprep.subr.bf16.mxu0 0
    %542 = vmatpush1.bf16.msra.mxu0 0
    %543 = vmatprep.subr.bf16.mxu0 0
    %544 = vmatpush1.bf16.msra.mxu0 0
    %545 = vmatprep.subr.bf16.mxu0 0
    %546 = vmatpush1.bf16.msra.mxu0 0
    %547 = vmatprep.subr.bf16.mxu0 0
    %548 = vmatpush1.bf16.msra.mxu0 0
    %549 = vmatprep.subr.bf16.mxu0 0
    %550 = vmatpush1.bf16.msra.mxu0 0
    %551 = vmatprep.subr.bf16.mxu0 0
    %552 = vmatpush1.bf16.msra.mxu0 0
    %553 = vmatprep.subr.bf16.mxu0 0
    %554 = vmatpush1.bf16.msra.mxu0 %v537
    %555 = vmatprep.subr.bf16.mxu0 0
    %556 = vmatpush2.bf16.msra.mxu0 0
    %557 = vmatprep.subr.bf16.mxu0 0
    %558 = vmatpush2.bf16.msra.mxu0 0
    %559 = vmatprep.subr.bf16.mxu0 0
    %560 = vmatpush2.bf16.msra.mxu0 0
    %561 = vmatprep.subr.bf16.mxu0 0
    %562 = vmatpush2.bf16.msra.mxu0 0
    %563 = vmatprep.subr.bf16.mxu0 0
    %564 = vmatpush2.bf16.msra.mxu0 0
    %565 = vmatprep.subr.bf16.mxu0 0
    %566 = vmatpush2.bf16.msra.mxu0 0
    %567 = vmatprep.subr.bf16.mxu0 0
    %568 = vmatpush2.bf16.msra.mxu0 0
    %569 = vmatprep.subr.bf16.mxu0 0
    %570 = vmatpush2.bf16.msra.mxu0 0
    %571 = vmatprep.mubr.bf16.mxu0 0
    %572 = vmatmul.mubr.bf16.gmra.mxu0 %v533
    %v573 = vpop.f32.mrf.mxu0
    %v574 = vadd.f32 %v519, %v573
    %v575 = vpop.f32.mrf.mxu0
    %v576 = vpop.f32.mrf.mxu0
    %v577 = vadd.f32 %v524, %v576
    %v578 = vpop.f32.mrf.mxu0
    %579 = vdwg.mxu0
    %v580 = vmax.f32 %v574, 0.0
    %v581 = vmax.f32 %v577, 0.0
    %v582 = vld [vmem:[%s5] sm:$0xf]
    %v583 = vld [vmem:[%s5 + $0x4] sm:$0xf]
    %v584 = vpack.c.bf16 %v581, %v580
    %v585 = vld [vmem:[%s6] sm:$0xff]
    %v586 = vld [vmem:[%s6 + $0x8] sm:$0xff]
    %588 = vset.pattern.permute.xlu0 0
    %589 = vperm.xlu0 %588, %v585
    %v590 = vpop.permute.xlu0 %589
    %593 = vset.pattern.permute.xlu0 0
    %594 = vperm.xlu0 %593, %v586
    %v595 = vpop.permute.xlu0 %594
    %v599 = vunpack.c.l.b16 %v582
    %v600 = vunpack.c.l.b16 %v583
    %v601 = vpack.c.b16 %v600, %v599
    %v603 = vsel %vm531, %v601, 0
    %v606 = vsel %vm535, %v584, 0
    %608 = vmatprep.subr.bf16.mxu0 0
    %609 = vmatpush1.bf16.msra.mxu0 0
    %610 = vmatprep.subr.bf16.mxu0 0
    %611 = vmatpush1.bf16.msra.mxu0 0
    %612 = vmatprep.subr.bf16.mxu0 0
    %613 = vmatpush1.bf16.msra.mxu0 0
    %614 = vmatprep.subr.bf16.mxu0 0
    %615 = vmatpush1.bf16.msra.mxu0 0
    %616 = vmatprep.subr.bf16.mxu0 0
    %617 = vmatpush1.bf16.msra.mxu0 0
    %618 = vmatprep.subr.bf16.mxu0 0
    %619 = vmatpush1.bf16.msra.mxu0 0
    %620 = vmatprep.subr.bf16.mxu0 0
    %621 = vmatpush1.bf16.msra.mxu0 0
    %622 = vmatprep.subr.bf16.mxu0 0
    %623 = vmatpush1.bf16.msra.mxu0 %v606
    %624 = vmatprep.subr.bf16.mxu0 0
    %625 = vmatpush2.bf16.msra.mxu0 0
    %626 = vmatprep.subr.bf16.mxu0 0
    %627 = vmatpush2.bf16.msra.mxu0 0
    %628 = vmatprep.subr.bf16.mxu0 0
    %629 = vmatpush2.bf16.msra.mxu0 0
    %630 = vmatprep.subr.bf16.mxu0 0
    %631 = vmatpush2.bf16.msra.mxu0 0
    %632 = vmatprep.subr.bf16.mxu0 0
    %633 = vmatpush2.bf16.msra.mxu0 0
    %634 = vmatprep.subr.bf16.mxu0 0
    %635 = vmatpush2.bf16.msra.mxu0 0
    %636 = vmatprep.subr.bf16.mxu0 0
    %637 = vmatpush2.bf16.msra.mxu0 0
    %638 = vmatprep.subr.bf16.mxu0 0
    %639 = vmatpush2.bf16.msra.mxu0 0
    %640 = vmatprep.mubr.bf16.mxu0 0
    %641 = vmatmul.mubr.bf16.gmra.mxu0 %v603
    %v642 = vpop.f32.mrf.mxu0
    %v643 = vadd.f32 %v590, %v642
    %v644 = vpop.f32.mrf.mxu0
    %v645 = vpop.f32.mrf.mxu0
    %v646 = vadd.f32 %v595, %v645
    %v647 = vpop.f32.mrf.mxu0
    %648 = vdwg.mxu0
    %v649 = vmax.f32 %v643, 0.0
    %v650 = vmax.f32 %v646, 0.0
    %651 = vst [vmem:[#allocation8] sm:$0xff] %v649
    %652 = vst [vmem:[#allocation8 + $0x8] sm:$0xff] %v650
    // Predicated region
    $region42: #{tpu_custom_call.1} parent=1 // pred_check
      _
    $region43: #{tpu_custom_call.1} parent=1 // pred_check_branch
      %654 = sbr.rel (0) target = $region45
    $region44: #{tpu_custom_call.1} parent=1 // pred_region
      %s656 = ssub.s32 256, 256
      %657 = vsyncadd [#allocation4], %s656
      %s658 = sshll.u32 [#allocation8], 4
      %s659 = int_to_ptr.vmem [resolvable:$true] %s658
      %664 = dma.vmem_to_hbm [thread:$0]  %s659, 256, %s7, [#allocation4], 128, 128, 8
    $region45: #{tpu_custom_call.1} parent=1 // pred_fallthru
      _
    // Predicated region
    $region46: #{tpu_custom_call.1} parent=1 // pred_check
      _
    $region47: #{tpu_custom_call.1} parent=1 // pred_check_branch
      %666 = sbr.rel (0) target = $region49
    $region48: #{tpu_custom_call.1} parent=1 // pred_region
      %s668 = ssub.s32 256, 256
      %669 = vsyncadd [#allocation10], %s668
      %s670 = sshll.u32 [#allocation9], 4
      %s671 = int_to_ptr.vmem [resolvable:$true] %s670
      %676 = dma.vmem_to_hbm [thread:$0]  %s671, 256, %s8, [#allocation10], 128, 128, 8
    $region49: #{tpu_custom_call.1} parent=1 // pred_fallthru
      _
    // Predicated region
    $region50: #{tpu_custom_call.1} parent=1 // pred_check
      _
    $region51: #{tpu_custom_call.1} parent=1 // pred_check_branch
      %678 = sbr.rel (0) target = $region53
    $region52: #{tpu_custom_call.1} parent=1 // pred_region
      %s680 = ssub.s32 16, 16
      %681 = vsyncadd [#allocation10], %s680
      %s683 = sshll.u32 [#allocation11], 4
      %s684 = int_to_ptr.vmem [resolvable:$true] %s683
      %686 = dma.vmem_to_hbm [thread:$0]  %s684, 16, %s9, [#allocation10]
    $region53: #{tpu_custom_call.1} parent=1 // pred_fallthru
      _
    // Predicated region
    $region54: #{tpu_custom_call.1} parent=1 // pred_check
      _
    $region55: #{tpu_custom_call.1} parent=1 // pred_check_branch
      %688 = sbr.rel (0) target = $region57
    $region56: #{tpu_custom_call.1} parent=1 // pred_region
      %689 = dma.done [#allocation4], 256
    $region57: #{tpu_custom_call.1} parent=1 // pred_fallthru
      _
    // Predicated region
    $region58: #{tpu_custom_call.1} parent=1 // pred_check
      _
    $region59: #{tpu_custom_call.1} parent=1 // pred_check_branch
      %691 = sbr.rel (0) target = $region61
    $region60: #{tpu_custom_call.1} parent=1 // pred_region
      %692 = dma.done [#allocation10], 256
    $region61: #{tpu_custom_call.1} parent=1 // pred_fallthru
      _
    // Predicated region
    $region62: #{tpu_custom_call.1} parent=1 // pred_check
      _
    $region63: #{tpu_custom_call.1} parent=1 // pred_check_branch
      %694 = sbr.rel (0) target = $region65
    $region64: #{tpu_custom_call.1} parent=1 // pred_region
      %695 = dma.done [#allocation10], 16
    $region65: #{tpu_custom_call.1} parent=1 // pred_fallthru
      _
    %696 = vsyncpa [#allocation3], 1
    %697 = vsyncpa [#allocation6], 1
    %698 = vsyncpa [#allocation4], 1
    %699 = vsyncpa [#allocation10], 1

</llo_original>
